<compile_context>
chip_gen: v5e
topology: v5e:2x2
jax: 0.10.0
libtpu: 0.0.40
codegen_flags: <defaults>
</compile_context>

<pallas_src>
import math
from functools import partial

import jax
import jax.numpy as jnp
from jax import lax
from jax.experimental import pallas as pl
from jax.experimental.pallas import tpu as pltpu

_INV_SQRT2 = 1.0 / math.sqrt(2.0)
_TANH_GELU_C = math.sqrt(2.0 / math.pi)

# Conservative tile budget: fits v7x (64 MiB physical VMEM) with headroom and
# is well under v5e/v6e's 128 MiB. The scoped limit below is raised to match.
_VMEM_TILE_BUDGET = 40 * 1024 * 1024
_VMEM_LIMIT_BYTES = 48 * 1024 * 1024


def _attention_pool_kernel(x_ref, m_ref, w1_ref, b1_ref, g_ref, be_ref,
                           w2_ref, b2_ref, o_ref, *, fast_math):
    # x_ref: (bt, T, D) compute dtype, m_ref: (bt, T) f32, w1: (D, D) compute
    # dtype, b1/gamma/beta/w2-row: (1, D) f32, b2: (1,) SMEM f32, o: (bt, D) f32.
    bt, T, D = x_ref.shape
    x3 = x_ref[...]                                    # (bt, T, D)
    x2 = x3.reshape(bt * T, D)                         # merge leading dims (layout no-op)

    # --- Linear 1 on the MXU: (bt*T, D) @ (D, D), f32 accumulation -----------
    h = jnp.dot(x2, w1_ref[...], preferred_element_type=jnp.float32) + b1_ref[...]

    # --- LayerNorm over features (biased variance, eps=1e-5, nn.LayerNorm) ---
    mu = jnp.mean(h, axis=-1, keepdims=True)
    var = jnp.mean((h - mu) * (h - mu), axis=-1, keepdims=True)
    hn = (h - mu) * lax.rsqrt(var + 1e-5) * g_ref[...] + be_ref[...]

    # --- GELU -----------------------------------------------------------------
    if fast_math:
        # tanh-approx GELU: one EUP tanh instead of the long erf VALU polynomial.
        ge = 0.5 * hn * (1.0 + jnp.tanh(_TANH_GELU_C * (hn + 0.044715 * hn * hn * hn)))
    else:
        # Exact erf GELU (nn.GELU default) for strict f32 parity.
        ge = 0.5 * hn * (1.0 + lax.erf(hn * _INV_SQRT2))

    # --- Linear 2 (out_features = 1) as VPU multiply + lane reduce ------------
    logits = jnp.sum(ge.reshape(bt, T, D) * w2_ref[...], axis=-1) + b2_ref[0]

    # --- Mask + softmax over the sequence axis (lane axis => vector-dense) ----
    # Exact 0.0 compare matches the reference 0/1 float mask; -inf matches the
    # PyTorch module (a fully-masked row would NaN there too).
    m = m_ref[...]                                     # (bt, T)
    logits = jnp.where(m == 0.0, -jnp.inf, logits)
    logits = logits - jnp.max(logits, axis=-1, keepdims=True)
    e = jnp.exp(logits)
    w = e * pl.reciprocal(jnp.sum(e, axis=-1, keepdims=True), approx=fast_math)

    # --- Weighted sum over T ---------------------------------------------------
    xf = x3.astype(jnp.float32)
    if T >= 128 and D >= 128:
        # Big enough for the MXU: batched (1, T) @ (T, D).
        pooled = jnp.einsum('bqt,btd->bqd', w[:, None, :], xf,
                            preferred_element_type=jnp.float32)[:, 0, :]
    else:
        # M=1 batched matmuls waste the systolic array; VPU mul + sublane reduce.
        pooled = jnp.sum(w[:, :, None] * xf, axis=1)
    o_ref[...] = pooled


def _pick_block_b(B, T, D, x_itemsize, vmem_budget_bytes):
    """Batch-tile size: bt*T >= 256 for MXU occupancy, multiple of 8 for
    sublane-dense blocks, capped by the (v7x-safe) VMEM budget, and leaving
    >= 2 grid steps for v7x megacore sharding when the batch allows."""
    bt = max(8, -(-256 // T))                 # bt*T >= 256
    bt = ((bt + 7) // 8) * 8
    Bp8 = ((B + 7) // 8) * 8
    bt = min(bt, Bp8)

    def est_vmem(b):
        x_tile = 2 * b * T * D * x_itemsize               # double-buffered x
        interm = 4 * b * T * D * 4                        # f32 working values (h, ge, x_f32, product)
        small = 2 * b * (T + D) * 4 + b * T * 4           # mask/out blocks + logits
        weights = 2 * D * D * x_itemsize + 8 * D * 4      # W1 (+double buffer) + row params
        return x_tile + interm + small + weights

    while bt > 8 and est_vmem(bt) > vmem_budget_bytes:
        bt -= 8

    # v7x has 2 TensorCores per chip; keep the 'parallel' grid axis >= 2 steps
    # when the batch is big enough (no effect on v5e/v6e).
    Bp = ((B + bt - 1) // bt) * bt
    if Bp // bt < 2 and Bp8 >= 16:
        bt = max(8, (Bp8 // 2) // 8 * 8)
    return bt


def attention_pool(x, mask, params, *, block_b=None,
                   compute_dtype=jnp.bfloat16, fast_math=None):
    """x: (B, T, D) f32, mask: (B, T) (0 = masked). Returns (B, D) f32.

    compute_dtype=bf16 (default) feeds the MXU bf16 operands (f32 accumulate)
    and enables approx GELU / reciprocal; compute_dtype=f32 is the strict
    parity path against the f32 PyTorch reference."""
    B, T, D = x.shape
    w1, b1, ln_g, ln_b, w2, b2 = params
    if fast_math is None:
        fast_math = (jnp.dtype(compute_dtype) != jnp.dtype(jnp.float32))

    # Cast matmul operands once in the wrapper (no per-step in-kernel casts);
    # everything feeding f32 vector math stays f32.
    x_k = x.astype(compute_dtype)
    w1_k = w1.astype(compute_dtype)
    b1_k = b1.reshape(1, D).astype(jnp.float32)
    g_k = ln_g.reshape(1, D).astype(jnp.float32)
    be_k = ln_b.reshape(1, D).astype(jnp.float32)
    w2_row = w2.reshape(1, D).astype(jnp.float32)      # (D, 1) -> (1, D)
    b2_s = b2.reshape(1).astype(jnp.float32)           # scalar for SMEM
    maskf = mask.astype(jnp.float32)

    itemsize = jnp.dtype(compute_dtype).itemsize
    bt = block_b if block_b is not None else _pick_block_b(
        B, T, D, itemsize, _VMEM_TILE_BUDGET)
    Bp = ((B + bt - 1) // bt) * bt
    if Bp != B:
        # Padded rows: x=0, mask=1 -> constant row through Linear-1 (var=0),
        # kept finite by the 1e-5 LN eps; sliced off below.
        x_k = jnp.pad(x_k, ((0, Bp - B), (0, 0), (0, 0)))
        maskf = jnp.pad(maskf, ((0, Bp - B), (0, 0)), constant_values=1.0)

    grid_spec = pltpu.PrefetchScalarGridSpec(
        num_scalar_prefetch=0,
        grid=(Bp // bt,),
        in_specs=[
            pl.BlockSpec((bt, T, D), lambda b: (b, 0, 0)),      # x tile
            pl.BlockSpec((bt, T), lambda b: (b, 0)),            # mask tile (lane-major T)
            pl.BlockSpec((D, D), lambda b: (0, 0)),             # W1 (in, out)
            pl.BlockSpec((1, D), lambda b: (0, 0)),             # b1
            pl.BlockSpec((1, D), lambda b: (0, 0)),             # LN gamma
            pl.BlockSpec((1, D), lambda b: (0, 0)),             # LN beta
            pl.BlockSpec((1, D), lambda b: (0, 0)),             # W2 as a row
            pl.BlockSpec(memory_space=pltpu.MemorySpace.SMEM),  # b2 scalar
        ],
        out_specs=pl.BlockSpec((bt, D), lambda b: (b, 0)),
    )
    out = pl.pallas_call(
        partial(_attention_pool_kernel, fast_math=fast_math),
        out_shape=jax.ShapeDtypeStruct((Bp, D), jnp.float32),
        grid_spec=grid_spec,
        compiler_params=pltpu.CompilerParams(
            dimension_semantics=("parallel",),
            vmem_limit_bytes=_VMEM_LIMIT_BYTES),
    )(x_k, maskf, w1_k, b1_k, g_k, be_k, w2_row, b2_s)
    return out[:B]


def attention_pool_ref(x, mask, params):
    """Pure-JAX reference mirroring the PyTorch forward (f32, exact erf GELU)."""
    w1, b1, ln_g, ln_b, w2, b2 = params
    h = x @ w1 + b1
    mu = jnp.mean(h, axis=-1, keepdims=True)
    var = jnp.mean((h - mu) ** 2, axis=-1, keepdims=True)
    hn = (h - mu) / jnp.sqrt(var + 1e-5) * ln_g + ln_b
    ge = 0.5 * hn * (1.0 + lax.erf(hn / jnp.sqrt(2.0)))
    w = (ge @ w2 + b2[0, 0]).astype(jnp.float32)          # (B, T, 1)
    w = jnp.where(mask[..., None] == 0, -jnp.inf, w)
    w = jax.nn.softmax(w, axis=1)
    return jnp.sum(w * x, axis=1)


def init_params(key, in_dim):
    """Deterministic synthetic init (shapes from the module's __init__)."""
    k1, k2, k3, k4 = jax.random.split(key, 4)
    s1 = 1.0 / math.sqrt(in_dim)
    w1 = jax.random.uniform(k1, (in_dim, in_dim), jnp.float32, -s1, s1)  # (in, out)
    b1 = jax.random.uniform(k2, (1, in_dim), jnp.float32, -s1, s1)
    ln_g = jnp.ones((1, in_dim), jnp.float32)
    ln_b = jnp.zeros((1, in_dim), jnp.float32)
    w2 = jax.random.uniform(k3, (in_dim, 1), jnp.float32, -s1, s1)
    b2 = jax.random.uniform(k4, (1, 1), jnp.float32, -s1, s1)
    return (w1, b1, ln_g, ln_b, w2, b2)


if __name__ == "__main__":
    B, T, D = 2, 8, 32
    key = jax.random.PRNGKey(0)
    kx, km, kp = jax.random.split(key, 3)

    x = jax.random.normal(kx, (B, T, D), jnp.float32)
    mask = (jax.random.uniform(km, (B, T)) > 0.3).astype(jnp.float32)
    mask = mask.at[:, 0].set(1.0)  # at least one unmasked position per row
    params = init_params(kp, D)

    ref = attention_pool_ref(x, mask, params)

    # Strict f32 parity path (exact erf GELU, exact divide).
    out_f32 = attention_pool(x, mask, params, compute_dtype=jnp.float32)
    out_f32 = jax.block_until_ready(out_f32)
    assert out_f32.shape == (B, D)
    assert jnp.allclose(out_f32, ref, atol=1e-4, rtol=1e-4), (out_f32, ref)

    # Default fast path: bf16 MXU operands, tanh GELU, approx EUP reciprocal.
    out_fast = attention_pool(x, mask, params)
    out_fast = jax.block_until_ready(out_fast)
    assert out_fast.shape == (B, D)
    assert jnp.allclose(out_fast, ref, atol=2e-2, rtol=2e-2), (out_fast, ref)

    print("KERNEL_OK")
</pallas_src>

<mosaic_0001>
module attributes {stable_mosaic.version = 11 : i64} {
  func.func @_attention_pool_kernel(%arg0: i32, %arg1: memref<8x8x32xf32, #tpu.memory_space<vmem>>, %arg2: memref<8x8xf32, #tpu.memory_space<vmem>>, %arg3: memref<32x32xf32, #tpu.memory_space<vmem>>, %arg4: memref<1x32xf32, #tpu.memory_space<vmem>>, %arg5: memref<1x32xf32, #tpu.memory_space<vmem>>, %arg6: memref<1x32xf32, #tpu.memory_space<vmem>>, %arg7: memref<1x32xf32, #tpu.memory_space<vmem>>, %arg8: memref<1xf32, #tpu.memory_space<smem>>, %arg9: memref<8x32xf32, #tpu.memory_space<vmem>>) attributes {dimension_semantics = [#tpu.dimension_semantics<parallel>], iteration_bounds = array<i64: 1>, scalar_prefetch = 0 : i64, scratch_operands = 0 : i64, tpu.core_type = #tpu.core_type<tc>, window_params = [{transform_indices = @transform_0, window_bounds = array<i64: 8, 8, 32>}, {transform_indices = @transform_1, window_bounds = array<i64: 8, 8>}, {pipeline_mode = #tpu.pipeline_mode<synchronous>, transform_indices = @transform_2, window_bounds = array<i64: 32, 32>}, {pipeline_mode = #tpu.pipeline_mode<synchronous>, transform_indices = @transform_3, window_bounds = array<i64: 1, 32>}, {pipeline_mode = #tpu.pipeline_mode<synchronous>, transform_indices = @transform_4, window_bounds = array<i64: 1, 32>}, {pipeline_mode = #tpu.pipeline_mode<synchronous>, transform_indices = @transform_5, window_bounds = array<i64: 1, 32>}, {pipeline_mode = #tpu.pipeline_mode<synchronous>, transform_indices = @transform_6, window_bounds = array<i64: 1, 32>}, {transform_indices = @transform_7, window_bounds = array<i64: 1>}, {transform_indices = @transform_8, window_bounds = array<i64: 8, 32>}]} {
    %c0 = arith.constant 0 : index
    %c0_0 = arith.constant 0 : index
    %c0_1 = arith.constant 0 : index
    %0 = vector.load %arg1[%c0, %c0_0, %c0_1] : memref<8x8x32xf32, #tpu.memory_space<vmem>>, vector<8x8x32xf32>
    %1 = vector.shape_cast %0 : vector<8x8x32xf32> to vector<64x32xf32>
    %c0_2 = arith.constant 0 : index
    %c0_3 = arith.constant 0 : index
    %2 = vector.load %arg3[%c0_2, %c0_3] : memref<32x32xf32, #tpu.memory_space<vmem>>, vector<32x32xf32>
    %cst = arith.constant dense<0.000000e+00> : vector<64x32xf32>
    %3 = tpu.matmul %1, %2, %cst {dimension_numbers = #tpu.dot_dimension_numbers<[1], [0], [0], [1], [0, 0, 1, 1], [], []>} : vector<64x32xf32>, vector<32x32xf32>, vector<64x32xf32> -> vector<64x32xf32>
    %c0_4 = arith.constant 0 : index
    %c0_5 = arith.constant 0 : index
    %4 = vector.load %arg4[%c0_4, %c0_5] : memref<1x32xf32, #tpu.memory_space<vmem>>, vector<1x32xf32>
    %5 = vector.broadcast %4 : vector<1x32xf32> to vector<64x32xf32>
    %6 = arith.addf %3, %5 : vector<64x32xf32>
    %cst_6 = arith.constant dense<0.000000e+00> : vector<64xf32>
    %7 = vector.multi_reduction <add>, %6, %cst_6 [1] : vector<64x32xf32> to vector<64xf32>
    %8 = vector.shape_cast %7 : vector<64xf32> to vector<64x1xf32>
    %cst_7 = arith.constant 3.200000e+01 : f32
    %9 = vector.broadcast %cst_7 : f32 to vector<64x1xf32>
    %10 = arith.divf %8, %9 : vector<64x1xf32>
    %11 = vector.broadcast %10 : vector<64x1xf32> to vector<64x32xf32>
    %12 = arith.subf %6, %11 : vector<64x32xf32>
    %13 = vector.broadcast %10 : vector<64x1xf32> to vector<64x32xf32>
    %14 = arith.subf %6, %13 : vector<64x32xf32>
    %15 = arith.mulf %12, %14 : vector<64x32xf32>
    %cst_8 = arith.constant dense<0.000000e+00> : vector<64xf32>
    %16 = vector.multi_reduction <add>, %15, %cst_8 [1] : vector<64x32xf32> to vector<64xf32>
    %17 = vector.shape_cast %16 : vector<64xf32> to vector<64x1xf32>
    %cst_9 = arith.constant 3.200000e+01 : f32
    %18 = vector.broadcast %cst_9 : f32 to vector<64x1xf32>
    %19 = arith.divf %17, %18 : vector<64x1xf32>
    %20 = vector.broadcast %10 : vector<64x1xf32> to vector<64x32xf32>
    %21 = arith.subf %6, %20 : vector<64x32xf32>
    %cst_10 = arith.constant 9.99999974E-6 : f32
    %22 = vector.broadcast %cst_10 : f32 to vector<64x1xf32>
    %23 = arith.addf %19, %22 : vector<64x1xf32>
    %24 = math.rsqrt %23 : vector<64x1xf32>
    %25 = vector.broadcast %24 : vector<64x1xf32> to vector<64x32xf32>
    %26 = arith.mulf %21, %25 : vector<64x32xf32>
    %c0_11 = arith.constant 0 : index
    %c0_12 = arith.constant 0 : index
    %27 = vector.load %arg5[%c0_11, %c0_12] : memref<1x32xf32, #tpu.memory_space<vmem>>, vector<1x32xf32>
    %28 = vector.broadcast %27 : vector<1x32xf32> to vector<64x32xf32>
    %29 = arith.mulf %26, %28 : vector<64x32xf32>
    %c0_13 = arith.constant 0 : index
    %c0_14 = arith.constant 0 : index
    %30 = vector.load %arg6[%c0_13, %c0_14] : memref<1x32xf32, #tpu.memory_space<vmem>>, vector<1x32xf32>
    %31 = vector.broadcast %30 : vector<1x32xf32> to vector<64x32xf32>
    %32 = arith.addf %29, %31 : vector<64x32xf32>
    %cst_15 = arith.constant 5.000000e-01 : f32
    %33 = vector.broadcast %cst_15 : f32 to vector<64x32xf32>
    %34 = arith.mulf %33, %32 : vector<64x32xf32>
    %cst_16 = arith.constant 0.707106769 : f32
    %35 = vector.broadcast %cst_16 : f32 to vector<64x32xf32>
    %36 = arith.mulf %32, %35 : vector<64x32xf32>
    %37 = math.erf %36 : vector<64x32xf32>
    %cst_17 = arith.constant 1.000000e+00 : f32
    %38 = vector.broadcast %cst_17 : f32 to vector<64x32xf32>
    %39 = arith.addf %38, %37 : vector<64x32xf32>
    %40 = arith.mulf %34, %39 : vector<64x32xf32>
    %41 = vector.shape_cast %40 : vector<64x32xf32> to vector<8x8x32xf32>
    %c0_18 = arith.constant 0 : index
    %c0_19 = arith.constant 0 : index
    %42 = vector.load %arg7[%c0_18, %c0_19] : memref<1x32xf32, #tpu.memory_space<vmem>>, vector<1x32xf32>
    %43 = vector.shape_cast %42 : vector<1x32xf32> to vector<1x1x32xf32>
    %44 = vector.broadcast %43 : vector<1x1x32xf32> to vector<8x8x32xf32>
    %45 = arith.mulf %41, %44 : vector<8x8x32xf32>
    %cst_20 = arith.constant dense<0.000000e+00> : vector<8x8xf32>
    %46 = vector.multi_reduction <add>, %45, %cst_20 [2] : vector<8x8x32xf32> to vector<8x8xf32>
    %c0_21 = arith.constant 0 : index
    %47 = memref.load %arg8[%c0_21] : memref<1xf32, #tpu.memory_space<smem>>
    %48 = vector.broadcast %47 : f32 to vector<8x8xf32>
    %49 = arith.addf %46, %48 : vector<8x8xf32>
    %c0_22 = arith.constant 0 : index
    %c0_23 = arith.constant 0 : index
    %50 = vector.load %arg2[%c0_22, %c0_23] : memref<8x8xf32, #tpu.memory_space<vmem>>, vector<8x8xf32>
    %cst_24 = arith.constant 0.000000e+00 : f32
    %51 = vector.broadcast %cst_24 : f32 to vector<8x8xf32>
    %52 = arith.cmpf oeq, %50, %51 : vector<8x8xf32>
    %cst_25 = arith.constant 0xFF800000 : f32
    %53 = vector.broadcast %cst_25 : f32 to vector<8x8xf32>
    %54 = arith.select %52, %53, %49 : vector<8x8xi1>, vector<8x8xf32>
    %cst_26 = arith.constant dense<0xFF800000> : vector<8xf32>
    %55 = vector.multi_reduction <maximumf>, %54, %cst_26 [1] : vector<8x8xf32> to vector<8xf32>
    %56 = vector.shape_cast %55 : vector<8xf32> to vector<8x1xf32>
    %57 = vector.broadcast %56 : vector<8x1xf32> to vector<8x8xf32>
    %58 = arith.subf %54, %57 : vector<8x8xf32>
    %59 = math.exp %58 : vector<8x8xf32>
    %cst_27 = arith.constant dense<0.000000e+00> : vector<8xf32>
    %60 = vector.multi_reduction <add>, %59, %cst_27 [1] : vector<8x8xf32> to vector<8xf32>
    %61 = vector.shape_cast %60 : vector<8xf32> to vector<8x1xf32>
    %62 = tpu.reciprocal %61 : vector<8x1xf32> -> vector<8x1xf32>
    %63 = vector.broadcast %62 : vector<8x1xf32> to vector<8x8xf32>
    %64 = arith.mulf %59, %63 : vector<8x8xf32>
    %65 = vector.shape_cast %64 : vector<8x8xf32> to vector<8x8x1xf32>
    %66 = vector.broadcast %65 : vector<8x8x1xf32> to vector<8x8x32xf32>
    %67 = arith.mulf %66, %0 : vector<8x8x32xf32>
    %cst_28 = arith.constant dense<0.000000e+00> : vector<8x32xf32>
    %68 = vector.multi_reduction <add>, %67, %cst_28 [1] : vector<8x8x32xf32> to vector<8x32xf32>
    %c0_29 = arith.constant 0 : index
    %c0_30 = arith.constant 0 : index
    %69 = vector.load %arg9[%c0_29, %c0_30] : memref<8x32xf32, #tpu.memory_space<vmem>>, vector<8x32xf32>
    tpu.vector_store %arg9[%c0_29, %c0_30], %68 {strides = array<i32>} : memref<8x32xf32, #tpu.memory_space<vmem>>, vector<8x32xf32>,
    return
  }
  func.func @transform_0(%arg0: i32) -> (i32, i32, i32) {
    %c0_i32 = arith.constant 0 : i32
    %c0_i32_0 = arith.constant 0 : i32
    %c0_i32_1 = arith.constant 0 : i32
    return %arg0, %c0_i32, %c0_i32_0 : i32, i32, i32
  }
  func.func @transform_1(%arg0: i32) -> (i32, i32) {
    %c0_i32 = arith.constant 0 : i32
    %c0_i32_0 = arith.constant 0 : i32
    return %arg0, %c0_i32 : i32, i32
  }
  func.func @transform_2(%arg0: i32) -> (i32, i32) {
    %c0_i32 = arith.constant 0 : i32
    %c0_i32_0 = arith.constant 0 : i32
    %c0_i32_1 = arith.constant 0 : i32
    return %c0_i32, %c0_i32_0 : i32, i32
  }
  func.func @transform_3(%arg0: i32) -> (i32, i32) {
    %c0_i32 = arith.constant 0 : i32
    %c0_i32_0 = arith.constant 0 : i32
    %c0_i32_1 = arith.constant 0 : i32
    return %c0_i32, %c0_i32_0 : i32, i32
  }
  func.func @transform_4(%arg0: i32) -> (i32, i32) {
    %c0_i32 = arith.constant 0 : i32
    %c0_i32_0 = arith.constant 0 : i32
    %c0_i32_1 = arith.constant 0 : i32
    return %c0_i32, %c0_i32_0 : i32, i32
  }
  func.func @transform_5(%arg0: i32) -> (i32, i32) {
    %c0_i32 = arith.constant 0 : i32
    %c0_i32_0 = arith.constant 0 : i32
    %c0_i32_1 = arith.constant 0 : i32
    return %c0_i32, %c0_i32_0 : i32, i32
  }
  func.func @transform_6(%arg0: i32) -> (i32, i32) {
    %c0_i32 = arith.constant 0 : i32
    %c0_i32_0 = arith.constant 0 : i32
    %c0_i32_1 = arith.constant 0 : i32
    return %c0_i32, %c0_i32_0 : i32, i32
  }
  func.func @transform_7(%arg0: i32) -> i32 {
    %c0_i32 = arith.constant 0 : i32
    %c0_i32_0 = arith.constant 0 : i32
    return %c0_i32 : i32
  }
  func.func @transform_8(%arg0: i32) -> (i32, i32) {
    %c0_i32 = arith.constant 0 : i32
    %c0_i32_0 = arith.constant 0 : i32
    return %arg0, %c0_i32 : i32, i32
  }
}

</mosaic_0001>

<llo_original>
// kernel: tpu_custom_call.1
$region0: #{tpu_custom_call.1}
  #allocation0 [shape = 'u32[]', space=smem, size = 0x4, offset = 0x4, fixed_abs, tag = 'smem constant byte address 0x4 - core index']
  #allocation1 [shape = 'u32[72,128]{1,0:T(1,128)}', space=vmem, size = 0x9000, scoped, tag = 'internal scratch']
  #allocation2 [shape = 'f32[1]{0:T(128)S(6)}', space=smem, size = 0x200, scoped, tag = 'scoped memory for tpu_custom_call.1']
  %s0 = inlined_call_operand.hbm [shape: f32[8,8,32], index: 0, kind: input, shape index: {}]
  %s1 = inlined_call_operand.hbm [shape: f32[8,8], index: 1, kind: input, shape index: {}]
  %s2 = inlined_call_operand.hbm [shape: f32[32,32], index: 2, kind: input, shape index: {}]
  %s3 = inlined_call_operand.vmem [shape: f32[1,32], index: 3, kind: input, shape index: {}]
  %s4 = inlined_call_operand.vmem [shape: f32[1,32], index: 4, kind: input, shape index: {}]
  %s5 = inlined_call_operand.vmem [shape: f32[1,32], index: 5, kind: input, shape index: {}]
  %s6 = inlined_call_operand.vmem [shape: f32[1,32], index: 6, kind: input, shape index: {}]
  %s7 = inlined_call_operand.<no memory space> [shape: f32[1], index: 7, kind: input, shape index: {}]
  %s8 = inlined_call_operand.hbm [shape: f32[8,32], index: 8, kind: output, shape index: {}]
  %s9 = sld [smem:[#allocation0]]
  $region54: #{tpu_custom_call.1} parent=0
    _
  %s11 = ssub.s32 1, %s9
  %s12 = scalar_select 0, %s11, %s9
  %13 = sst [smem:[#allocation2]] %s7
  $region1: #{tpu_custom_call.1} parent=0
    #allocation3 [shape = 'u8[32768]{0}', space=vmem, size = 0x8000, scoped, tag = 'input window, operand 0, single buffered']
    #allocation4 [shape = 's32[1]{0}', space=sflag, size = 0x4, scoped, tag = 'scoped memory for tpu_custom_call.1']
    #allocation5 [shape = 's32[1]{0}', space=sflag, size = 0x4, scoped, tag = 'scoped memory for tpu_custom_call.1']
    #allocation6 [shape = 'u8[4096]{0}', space=vmem, size = 0x1000, scoped, tag = 'input window, operand 1, single buffered']
    #allocation7 [shape = 's32[1]{0}', space=sflag, size = 0x4, scoped, tag = 'scoped memory for tpu_custom_call.1']
    #allocation8 [shape = 'u8[16384]{0}', space=vmem, size = 0x4000, scoped, tag = 'input window, operand 2, single buffered']
    #allocation9 [shape = 'u8[4096]{0}', space=vmem, size = 0x1000, scoped, tag = 'output window, operand 0, single buffered']
    %14 = vsyncpa [#allocation4], 0
    %15 = vsyncpa [#allocation7], 0
    %16 = vsyncpa [#allocation5], 0
    // Predicated region
    $region2: #{tpu_custom_call.1} parent=1 // pred_check
      _
    $region3: #{tpu_custom_call.1} parent=1 // pred_check_branch
      %18 = sbr.rel (0) target = $region5
    $region4: #{tpu_custom_call.1} parent=1 // pred_region
      %20 = vsyncadd [#allocation4], 0
      %s21 = sshll.u32 %s0, 4
      %s22 = int_to_ptr.hbm [resolvable:$true] %s21
      %s23 = sshll.u32 [#allocation3], 4
      %s24 = int_to_ptr.vmem [resolvable:$true] %s23
      %29 = dma.hbm_to_vmem [thread:$0]  %s22, 1024, %s24, [#allocation4], 128, 128, 8
    $region5: #{tpu_custom_call.1} parent=1 // pred_fallthru
      _
    // Predicated region
    $region6: #{tpu_custom_call.1} parent=1 // pred_check
      _
    $region7: #{tpu_custom_call.1} parent=1 // pred_check_branch
      %31 = sbr.rel (0) target = $region9
    $region8: #{tpu_custom_call.1} parent=1 // pred_region
      %33 = vsyncadd [#allocation7], 0
      %s35 = sshll.u32 %s1, 4
      %s36 = int_to_ptr.hbm [resolvable:$true] %s35
      %s37 = sshll.u32 [#allocation6], 4
      %s38 = int_to_ptr.vmem [resolvable:$true] %s37
      %40 = dma.hbm_to_vmem [thread:$0]  %s36, 128, %s38, [#allocation7]
    $region9: #{tpu_custom_call.1} parent=1 // pred_fallthru
      _
    // Predicated region
    $region10: #{tpu_custom_call.1} parent=1 // pred_check
      _
    $region11: #{tpu_custom_call.1} parent=1 // pred_check_branch
      %42 = sbr.rel (0) target = $region13
    $region12: #{tpu_custom_call.1} parent=1 // pred_region
      %44 = vsyncadd [#allocation7], 0
      %s45 = sshll.u32 %s2, 4
      %s46 = int_to_ptr.hbm [resolvable:$true] %s45
      %s47 = sshll.u32 [#allocation8], 4
      %s48 = int_to_ptr.vmem [resolvable:$true] %s47
      %53 = dma.hbm_to_vmem [thread:$0]  %s46, 512, %s48, [#allocation7], 128, 128, 8
    $region13: #{tpu_custom_call.1} parent=1 // pred_fallthru
      _
    // Predicated region
    $region14: #{tpu_custom_call.1} parent=1 // pred_check
      _
    $region15: #{tpu_custom_call.1} parent=1 // pred_check_branch
      %55 = sbr.rel (0) target = $region17
    $region16: #{tpu_custom_call.1} parent=1 // pred_region
      _
    $region17: #{tpu_custom_call.1} parent=1 // pred_fallthru
      _
    // Predicated region
    $region18: #{tpu_custom_call.1} parent=1 // pred_check
      _
    $region19: #{tpu_custom_call.1} parent=1 // pred_check_branch
      %57 = sbr.rel (0) target = $region21
    $region20: #{tpu_custom_call.1} parent=1 // pred_region
      _
    $region21: #{tpu_custom_call.1} parent=1 // pred_fallthru
      _
    // Predicated region
    $region22: #{tpu_custom_call.1} parent=1 // pred_check
      _
    $region23: #{tpu_custom_call.1} parent=1 // pred_check_branch
      %59 = sbr.rel (0) target = $region25
    $region24: #{tpu_custom_call.1} parent=1 // pred_region
      _
    $region25: #{tpu_custom_call.1} parent=1 // pred_fallthru
      _
    // Predicated region
    $region26: #{tpu_custom_call.1} parent=1 // pred_check
      _
    $region27: #{tpu_custom_call.1} parent=1 // pred_check_branch
      %61 = sbr.rel (0) target = $region29
    $region28: #{tpu_custom_call.1} parent=1 // pred_region
      _
    $region29: #{tpu_custom_call.1} parent=1 // pred_fallthru
      _
    // Predicated region
    $region30: #{tpu_custom_call.1} parent=1 // pred_check
      _
    $region31: #{tpu_custom_call.1} parent=1 // pred_check_branch
      %63 = sbr.rel (0) target = $region33
    $region32: #{tpu_custom_call.1} parent=1 // pred_region
      _
    $region33: #{tpu_custom_call.1} parent=1 // pred_fallthru
      _
    // Predicated region
    $region34: #{tpu_custom_call.1} parent=1 // pred_check
      _
    $region35: #{tpu_custom_call.1} parent=1 // pred_check_branch
      %65 = sbr.rel (0) target = $region37
    $region36: #{tpu_custom_call.1} parent=1 // pred_region
      %67 = dma.done [#allocation4], 1024
    $region37: #{tpu_custom_call.1} parent=1 // pred_fallthru
      _
    // Predicated region
    $region38: #{tpu_custom_call.1} parent=1 // pred_check
      _
    $region39: #{tpu_custom_call.1} parent=1 // pred_check_branch
      %69 = sbr.rel (0) target = $region41
    $region40: #{tpu_custom_call.1} parent=1 // pred_region
      %71 = dma.done [#allocation7], 128
    $region41: #{tpu_custom_call.1} parent=1 // pred_fallthru
      _
    // Predicated region
    $region42: #{tpu_custom_call.1} parent=1 // pred_check
      _
    $region43: #{tpu_custom_call.1} parent=1 // pred_check_branch
      %73 = sbr.rel (0) target = $region45
    $region44: #{tpu_custom_call.1} parent=1 // pred_region
      %75 = dma.done [#allocation7], 512
    $region45: #{tpu_custom_call.1} parent=1 // pred_fallthru
      _
    %v76 = vld [vmem:[#allocation3] sm:$0xff]
    %v77 = vld [vmem:[#allocation3 + $0x8] sm:$0xff]
    %v78 = vld [vmem:[#allocation3 + $0x10] sm:$0xff]
    %v79 = vld [vmem:[#allocation3 + $0x18] sm:$0xff]
    %v80 = vld [vmem:[#allocation3 + $0x20] sm:$0xff]
    %v81 = vld [vmem:[#allocation3 + $0x28] sm:$0xff]
    %v82 = vld [vmem:[#allocation3 + $0x30] sm:$0xff]
    %v83 = vld [vmem:[#allocation3 + $0x38] sm:$0xff]
    %v84 = vld [vmem:[#allocation8] sm:$0xff]
    %v85 = vld [vmem:[#allocation8 + $0x8] sm:$0xff]
    %v86 = vld [vmem:[#allocation8 + $0x10] sm:$0xff]
    %v87 = vld [vmem:[#allocation8 + $0x18] sm:$0xff]
    %v88 = vld [vmem:[%s3] sm:$0x1]
    %v90 = vperm.slane %v88, 0
    %vm92 = vcmask 261120
    %v94 = vsel %vm92, %v76, 0
    %v97 = vsel %vm92, %v77, 0
    %v100 = vsel %vm92, %v78, 0
    %v103 = vsel %vm92, %v79, 0
    %v106 = vsel %vm92, %v80, 0
    %v109 = vsel %vm92, %v81, 0
    %v112 = vsel %vm92, %v82, 0
    %v115 = vsel %vm92, %v83, 0
    %117 = vmatpush.msra.mxu0 0.0
    %118 = vmatpush.msra.mxu0 0.0
    %119 = vmatpush.msra.mxu0 0.0
    %120 = vmatpush.msra.mxu0 0.0
    %121 = vmatpush.msra.mxu0 0.0
    %122 = vmatpush.msra.mxu0 0.0
    %123 = vmatpush.msra.mxu0 0.0
    %124 = vmatpush.msra.mxu0 0.0
    %125 = vmatpush.msra.mxu0 0.0
    %126 = vmatpush.msra.mxu0 0.0
    %127 = vmatpush.msra.mxu0 0.0
    %128 = vmatpush.msra.mxu0 0.0
    %129 = vmatpush.msra.mxu0 %v87
    %130 = vmatpush.msra.mxu0 %v86
    %131 = vmatpush.msra.mxu0 %v85
    %132 = vmatpush.msra.mxu0 %v84
    %133 = vmatmul.f32.gmra.mxu0 %v94
    %v134 = vpop.f32.mrf.mxu0
    %v135 = vadd.f32 %v90, %v134
    %136 = vmatmul.f32.gmra.mxu0 %v97
    %v137 = vpop.f32.mrf.mxu0
    %v138 = vadd.f32 %v90, %v137
    %139 = vmatmul.f32.gmra.mxu0 %v100
    %v140 = vpop.f32.mrf.mxu0
    %v141 = vadd.f32 %v90, %v140
    %142 = vmatmul.f32.gmra.mxu0 %v103
    %v143 = vpop.f32.mrf.mxu0
    %v144 = vadd.f32 %v90, %v143
    %145 = vmatmul.f32.gmra.mxu0 %v106
    %v146 = vpop.f32.mrf.mxu0
    %v147 = vadd.f32 %v90, %v146
    %148 = vmatmul.f32.gmra.mxu0 %v109
    %v149 = vpop.f32.mrf.mxu0
    %v150 = vadd.f32 %v90, %v149
    %151 = vmatmul.f32.gmra.mxu0 %v112
    %v152 = vpop.f32.mrf.mxu0
    %v153 = vadd.f32 %v90, %v152
    %154 = vmatmul.f32.gmra.mxu0 %v115
    %v155 = vpop.f32.mrf.mxu0
    %v156 = vadd.f32 %v90, %v155
    %157 = vdwg.mxu0
    %v158 = vsel %vm92, %v135, 0.0
    %159 = vadd.xlane.f32.xlu0 %v158
    %v160 = vpop.xlane.xlu0 %159
    %v161 = vsel %vm92, %v138, 0.0
    %162 = vadd.xlane.f32.xlu0 %v161
    %v163 = vpop.xlane.xlu0 %162
    %v164 = vsel %vm92, %v141, 0.0
    %165 = vadd.xlane.f32.xlu0 %v164
    %v166 = vpop.xlane.xlu0 %165
    %v167 = vsel %vm92, %v144, 0.0
    %168 = vadd.xlane.f32.xlu0 %v167
    %v169 = vpop.xlane.xlu0 %168
    %v170 = vsel %vm92, %v147, 0.0
    %171 = vadd.xlane.f32.xlu0 %v170
    %v172 = vpop.xlane.xlu0 %171
    %v173 = vsel %vm92, %v150, 0.0
    %174 = vadd.xlane.f32.xlu0 %v173
    %v175 = vpop.xlane.xlu0 %174
    %v176 = vsel %vm92, %v153, 0.0
    %177 = vadd.xlane.f32.xlu0 %v176
    %v178 = vpop.xlane.xlu0 %177
    %v179 = vsel %vm92, %v156, 0.0
    %180 = vadd.xlane.f32.xlu0 %v179
    %v181 = vpop.xlane.xlu0 %180
    %v182 = vrcp.pop 32.0
    %v183 = vmul.f32 32.0, %v182
    %v184 = vsub.f32 1.0, %v183
    %v185 = vmul.f32 %v182, %v184
    %v186 = vadd.f32 %v182, %v185
    %vm187 = vweird.f32 %v182
    %v188 = vsel %vm187, %v182, %v186
    %v189 = vmul.f32 %v160, %v188
    %v190 = vmul.f32 %v163, %v188
    %v191 = vmul.f32 %v166, %v188
    %v192 = vmul.f32 %v169, %v188
    %v193 = vmul.f32 %v172, %v188
    %v194 = vmul.f32 %v175, %v188
    %v195 = vmul.f32 %v178, %v188
    %v196 = vmul.f32 %v181, %v188
    %v197 = vsub.f32 %v135, %v189
    %v198 = vsub.f32 %v138, %v190
    %v199 = vsub.f32 %v141, %v191
    %v200 = vsub.f32 %v144, %v192
    %v201 = vsub.f32 %v147, %v193
    %v202 = vsub.f32 %v150, %v194
    %v203 = vsub.f32 %v153, %v195
    %v204 = vsub.f32 %v156, %v196
    %v205 = vmul.f32 %v197, %v197
    %v206 = vmul.f32 %v198, %v198
    %v207 = vmul.f32 %v199, %v199
    %v208 = vmul.f32 %v200, %v200
    %v209 = vmul.f32 %v201, %v201
    %v210 = vmul.f32 %v202, %v202
    %v211 = vmul.f32 %v203, %v203
    %v212 = vmul.f32 %v204, %v204
    %v213 = vsel %vm92, %v205, 0.0
    %214 = vadd.xlane.f32.xlu0 %v213
    %v215 = vpop.xlane.xlu0 %214
    %v216 = vsel %vm92, %v206, 0.0
    %217 = vadd.xlane.f32.xlu0 %v216
    %v218 = vpop.xlane.xlu0 %217
    %v219 = vsel %vm92, %v207, 0.0
    %220 = vadd.xlane.f32.xlu0 %v219
    %v221 = vpop.xlane.xlu0 %220
    %v222 = vsel %vm92, %v208, 0.0
    %223 = vadd.xlane.f32.xlu0 %v222
    %v224 = vpop.xlane.xlu0 %223
    %v225 = vsel %vm92, %v209, 0.0
    %226 = vadd.xlane.f32.xlu0 %v225
    %v227 = vpop.xlane.xlu0 %226
    %v228 = vsel %vm92, %v210, 0.0
    %229 = vadd.xlane.f32.xlu0 %v228
    %v230 = vpop.xlane.xlu0 %229
    %v231 = vsel %vm92, %v211, 0.0
    %232 = vadd.xlane.f32.xlu0 %v231
    %v233 = vpop.xlane.xlu0 %232
    %v234 = vsel %vm92, %v212, 0.0
    %235 = vadd.xlane.f32.xlu0 %v234
    %v236 = vpop.xlane.xlu0 %235
    %v237 = vmul.f32 %v215, %v188
    %v238 = vmul.f32 %v218, %v188
    %v239 = vmul.f32 %v221, %v188
    %v240 = vmul.f32 %v224, %v188
    %v241 = vmul.f32 %v227, %v188
    %v242 = vmul.f32 %v230, %v188
    %v243 = vmul.f32 %v233, %v188
    %v244 = vmul.f32 %v236, %v188
    %v245 = vadd.f32 %v237, 1e-05
    %v246 = vadd.f32 %v238, 1e-05
    %v247 = vadd.f32 %v239, 1e-05
    %v248 = vadd.f32 %v240, 1e-05
    %v249 = vadd.f32 %v241, 1e-05
    %v250 = vadd.f32 %v242, 1e-05
    %v251 = vadd.f32 %v243, 1e-05
    %v252 = vadd.f32 %v244, 1e-05
    %v253 = vrsqrt.pop %v245
    %v254 = vmul.f32 %v253, %v245
    %v255 = vmul.f32 %v254, %v253
    %v256 = vmul.f32 0.5, %v255
    %v257 = vsub.f32 1.5, %v256
    %v258 = vmul.f32 %v253, %v257
    %vm259 = vweird.f32 %v245
    %vm260 = vweird.f32 %v253
    %vm261 = vmor %vm259, %vm260
    %v262 = vsel %vm261, %v253, %v258
    %v263 = vrsqrt.pop %v246
    %v264 = vmul.f32 %v263, %v246
    %v265 = vmul.f32 %v264, %v263
    %v266 = vmul.f32 0.5, %v265
    %v267 = vsub.f32 1.5, %v266
    %v268 = vmul.f32 %v263, %v267
    %vm269 = vweird.f32 %v246
    %vm270 = vweird.f32 %v263
    %vm271 = vmor %vm269, %vm270
    %v272 = vsel %vm271, %v263, %v268
    %v273 = vrsqrt.pop %v247
    %v274 = vmul.f32 %v273, %v247
    %v275 = vmul.f32 %v274, %v273
    %v276 = vmul.f32 0.5, %v275
    %v277 = vsub.f32 1.5, %v276
    %v278 = vmul.f32 %v273, %v277
    %vm279 = vweird.f32 %v247
    %vm280 = vweird.f32 %v273
    %vm281 = vmor %vm279, %vm280
    %v282 = vsel %vm281, %v273, %v278
    %v283 = vrsqrt.pop %v248
    %v284 = vmul.f32 %v283, %v248
    %v285 = vmul.f32 %v284, %v283
    %v286 = vmul.f32 0.5, %v285
    %v287 = vsub.f32 1.5, %v286
    %v288 = vmul.f32 %v283, %v287
    %vm289 = vweird.f32 %v248
    %vm290 = vweird.f32 %v283
    %vm291 = vmor %vm289, %vm290
    %v292 = vsel %vm291, %v283, %v288
    %v293 = vrsqrt.pop %v249
    %v294 = vmul.f32 %v293, %v249
    %v295 = vmul.f32 %v294, %v293
    %v296 = vmul.f32 0.5, %v295
    %v297 = vsub.f32 1.5, %v296
    %v298 = vmul.f32 %v293, %v297
    %vm299 = vweird.f32 %v249
    %vm300 = vweird.f32 %v293
    %vm301 = vmor %vm299, %vm300
    %v302 = vsel %vm301, %v293, %v298
    %v303 = vrsqrt.pop %v250
    %v304 = vmul.f32 %v303, %v250
    %v305 = vmul.f32 %v304, %v303
    %v306 = vmul.f32 0.5, %v305
    %v307 = vsub.f32 1.5, %v306
    %v308 = vmul.f32 %v303, %v307
    %vm309 = vweird.f32 %v250
    %vm310 = vweird.f32 %v303
    %vm311 = vmor %vm309, %vm310
    %v312 = vsel %vm311, %v303, %v308
    %v313 = vrsqrt.pop %v251
    %v314 = vmul.f32 %v313, %v251
    %v315 = vmul.f32 %v314, %v313
    %v316 = vmul.f32 0.5, %v315
    %v317 = vsub.f32 1.5, %v316
    %v318 = vmul.f32 %v313, %v317
    %vm319 = vweird.f32 %v251
    %vm320 = vweird.f32 %v313
    %vm321 = vmor %vm319, %vm320
    %v322 = vsel %vm321, %v313, %v318
    %v323 = vrsqrt.pop %v252
    %v324 = vmul.f32 %v323, %v252
    %v325 = vmul.f32 %v324, %v323
    %v326 = vmul.f32 0.5, %v325
    %v327 = vsub.f32 1.5, %v326
    %v328 = vmul.f32 %v323, %v327
    %vm329 = vweird.f32 %v252
    %vm330 = vweird.f32 %v323
    %vm331 = vmor %vm329, %vm330
    %v332 = vsel %vm331, %v323, %v328
    %v333 = vmul.f32 %v197, %v262
    %v334 = vmul.f32 %v198, %v272
    %v335 = vmul.f32 %v199, %v282
    %v336 = vmul.f32 %v200, %v292
    %v337 = vmul.f32 %v201, %v302
    %v338 = vmul.f32 %v202, %v312
    %v339 = vmul.f32 %v203, %v322
    %v340 = vmul.f32 %v204, %v332
    %v341 = vld [vmem:[%s4] sm:$0x1]
    %v343 = vperm.slane %v341, 0
    %v345 = vmul.f32 %v333, %v343
    %v346 = vmul.f32 %v334, %v343
    %v347 = vmul.f32 %v335, %v343
    %v348 = vmul.f32 %v336, %v343
    %v349 = vmul.f32 %v337, %v343
    %v350 = vmul.f32 %v338, %v343
    %v351 = vmul.f32 %v339, %v343
    %v352 = vmul.f32 %v340, %v343
    %v353 = vld [vmem:[%s5] sm:$0x1]
    %v355 = vperm.slane %v353, 0
    %v357 = vadd.f32 %v345, %v355
    %v358 = vadd.f32 %v346, %v355
    %v359 = vadd.f32 %v347, %v355
    %v360 = vadd.f32 %v348, %v355
    %v361 = vadd.f32 %v349, %v355
    %v362 = vadd.f32 %v350, %v355
    %v363 = vadd.f32 %v351, %v355
    %v364 = vadd.f32 %v352, %v355
    %v365 = vmul.f32 %v357, 0.5
    %v366 = vmul.f32 %v358, 0.5
    %v367 = vmul.f32 %v359, 0.5
    %v368 = vmul.f32 %v360, 0.5
    %v369 = vmul.f32 %v361, 0.5
    %v370 = vmul.f32 %v362, 0.5
    %v371 = vmul.f32 %v363, 0.5
    %v372 = vmul.f32 %v364, 0.5
    %v373 = vmul.f32 %v357, 0.70710677
    %v374 = vmul.f32 %v358, 0.70710677
    %v375 = vmul.f32 %v359, 0.70710677
    %v376 = vmul.f32 %v360, 0.70710677
    %v377 = vmul.f32 %v361, 0.70710677
    %v378 = vmul.f32 %v362, 0.70710677
    %v379 = vmul.f32 %v363, 0.70710677
    %v380 = vmul.f32 %v364, 0.70710677
    %v381 = vmul.f32 %v373, %v373
    %v382 = vmin.f32 16.0, %v381
    %v383 = vmul.f32 %v382, 2.1237322e-06
    %v384 = vadd.f32 %v383, 0.00028619796
    %v385 = vmul.f32 %v382, %v384
    %v386 = vadd.f32 %v385, 0.0036580483
    %v387 = vmul.f32 %v382, %v386
    %v388 = vadd.f32 %v387, 0.05243302
    %v389 = vmul.f32 %v382, %v388
    %v390 = vadd.f32 %v389, 0.18741608
    %v391 = vmul.f32 %v382, %v390
    %v392 = vadd.f32 %v391, 1.1283791
    %v393 = vmul.f32 %v373, %v392
    %v394 = vmul.f32 %v382, 3.8918573e-05
    %v395 = vadd.f32 %v394, 0.001143296
    %v396 = vmul.f32 %v382, %v395
    %v397 = vadd.f32 %v396, 0.014752088
    %v398 = vmul.f32 %v382, %v397
    %v399 = vadd.f32 %v398, 0.112945676
    %v400 = vmul.f32 %v382, %v399
    %v401 = vadd.f32 %v400, 0.4994258
    %v402 = vmul.f32 %v382, %v401
    %v403 = vadd.f32 %v402, 1.0
    %v404 = vrcp.pop %v403
    %v405 = vmul.f32 %v403, %v404
    %v406 = vsub.f32 1.0, %v405
    %v407 = vmul.f32 %v404, %v406
    %v408 = vadd.f32 %v404, %v407
    %vm409 = vweird.f32 %v403
    %vm410 = vweird.f32 %v404
    %vm411 = vmor %vm409, %vm410
    %v412 = vsel %vm411, %v404, %v408
    %v413 = vand.u32 2147483647, %v403
    %vm414 = vcmp.eq.f32.partialorder %v413, 8.507059e+37
    %v415 = vand.u32 %v403, 2147483648
    %v416 = vor.u32 1.1754944e-38, %v415
    %v417 = vsel %vm414, %v416, %v412
    %v418 = vmul.f32 %v393, %v417
    %v419 = vmin.f32 %v418, 1.0
    %v420 = vmax.f32 %v419, -1.0
    %v421 = vmul.f32 %v374, %v374
    %v422 = vmin.f32 16.0, %v421
    %v423 = vmul.f32 %v422, 2.1237322e-06
    %v424 = vadd.f32 %v423, 0.00028619796
    %v425 = vmul.f32 %v422, %v424
    %v426 = vadd.f32 %v425, 0.0036580483
    %v427 = vmul.f32 %v422, %v426
    %v428 = vadd.f32 %v427, 0.05243302
    %v429 = vmul.f32 %v422, %v428
    %v430 = vadd.f32 %v429, 0.18741608
    %v431 = vmul.f32 %v422, %v430
    %v432 = vadd.f32 %v431, 1.1283791
    %v433 = vmul.f32 %v374, %v432
    %v434 = vmul.f32 %v422, 3.8918573e-05
    %v435 = vadd.f32 %v434, 0.001143296
    %v436 = vmul.f32 %v422, %v435
    %v437 = vadd.f32 %v436, 0.014752088
    %v438 = vmul.f32 %v422, %v437
    %v439 = vadd.f32 %v438, 0.112945676
    %v440 = vmul.f32 %v422, %v439
    %v441 = vadd.f32 %v440, 0.4994258
    %v442 = vmul.f32 %v422, %v441
    %v443 = vadd.f32 %v442, 1.0
    %v444 = vrcp.pop %v443
    %v445 = vmul.f32 %v443, %v444
    %v446 = vsub.f32 1.0, %v445
    %v447 = vmul.f32 %v444, %v446
    %v448 = vadd.f32 %v444, %v447
    %vm449 = vweird.f32 %v443
    %vm450 = vweird.f32 %v444
    %vm451 = vmor %vm449, %vm450
    %v452 = vsel %vm451, %v444, %v448
    %v453 = vand.u32 2147483647, %v443
    %vm454 = vcmp.eq.f32.partialorder %v453, 8.507059e+37
    %v455 = vand.u32 %v443, 2147483648
    %v456 = vor.u32 1.1754944e-38, %v455
    %v457 = vsel %vm454, %v456, %v452
    %v458 = vmul.f32 %v433, %v457
    %v459 = vmin.f32 %v458, 1.0
    %v460 = vmax.f32 %v459, -1.0
    %v461 = vmul.f32 %v375, %v375
    %v462 = vmin.f32 16.0, %v461
    %v463 = vmul.f32 %v462, 2.1237322e-06
    %v464 = vadd.f32 %v463, 0.00028619796
    %v465 = vmul.f32 %v462, %v464
    %v466 = vadd.f32 %v465, 0.0036580483
    %v467 = vmul.f32 %v462, %v466
    %v468 = vadd.f32 %v467, 0.05243302
    %v469 = vmul.f32 %v462, %v468
    %v470 = vadd.f32 %v469, 0.18741608
    %v471 = vmul.f32 %v462, %v470
    %v472 = vadd.f32 %v471, 1.1283791
    %v473 = vmul.f32 %v375, %v472
    %v474 = vmul.f32 %v462, 3.8918573e-05
    %v475 = vadd.f32 %v474, 0.001143296
    %v476 = vmul.f32 %v462, %v475
    %v477 = vadd.f32 %v476, 0.014752088
    %v478 = vmul.f32 %v462, %v477
    %v479 = vadd.f32 %v478, 0.112945676
    %v480 = vmul.f32 %v462, %v479
    %v481 = vadd.f32 %v480, 0.4994258
    %v482 = vmul.f32 %v462, %v481
    %v483 = vadd.f32 %v482, 1.0
    %v484 = vrcp.pop %v483
    %v485 = vmul.f32 %v483, %v484
    %v486 = vsub.f32 1.0, %v485
    %v487 = vmul.f32 %v484, %v486
    %v488 = vadd.f32 %v484, %v487
    %vm489 = vweird.f32 %v483
    %vm490 = vweird.f32 %v484
    %vm491 = vmor %vm489, %vm490
    %v492 = vsel %vm491, %v484, %v488
    %v493 = vand.u32 2147483647, %v483
    %vm494 = vcmp.eq.f32.partialorder %v493, 8.507059e+37
    %v495 = vand.u32 %v483, 2147483648
    %v496 = vor.u32 1.1754944e-38, %v495
    %v497 = vsel %vm494, %v496, %v492
    %v498 = vmul.f32 %v473, %v497
    %v499 = vmin.f32 %v498, 1.0
    %v500 = vmax.f32 %v499, -1.0
    %v501 = vmul.f32 %v376, %v376
    %v502 = vmin.f32 16.0, %v501
    %v503 = vmul.f32 %v502, 2.1237322e-06
    %v504 = vadd.f32 %v503, 0.00028619796
    %v505 = vmul.f32 %v502, %v504
    %v506 = vadd.f32 %v505, 0.0036580483
    %v507 = vmul.f32 %v502, %v506
    %v508 = vadd.f32 %v507, 0.05243302
    %v509 = vmul.f32 %v502, %v508
    %v510 = vadd.f32 %v509, 0.18741608
    %v511 = vmul.f32 %v502, %v510
    %v512 = vadd.f32 %v511, 1.1283791
    %v513 = vmul.f32 %v376, %v512
    %v514 = vmul.f32 %v502, 3.8918573e-05
    %v515 = vadd.f32 %v514, 0.001143296
    %v516 = vmul.f32 %v502, %v515
    %v517 = vadd.f32 %v516, 0.014752088
    %v518 = vmul.f32 %v502, %v517
    %v519 = vadd.f32 %v518, 0.112945676
    %v520 = vmul.f32 %v502, %v519
    %v521 = vadd.f32 %v520, 0.4994258
    %v522 = vmul.f32 %v502, %v521
    %v523 = vadd.f32 %v522, 1.0
    %v524 = vrcp.pop %v523
    %v525 = vmul.f32 %v523, %v524
    %v526 = vsub.f32 1.0, %v525
    %v527 = vmul.f32 %v524, %v526
    %v528 = vadd.f32 %v524, %v527
    %vm529 = vweird.f32 %v523
    %vm530 = vweird.f32 %v524
    %vm531 = vmor %vm529, %vm530
    %v532 = vsel %vm531, %v524, %v528
    %v533 = vand.u32 2147483647, %v523
    %vm534 = vcmp.eq.f32.partialorder %v533, 8.507059e+37
    %v535 = vand.u32 %v523, 2147483648
    %v536 = vor.u32 1.1754944e-38, %v535
    %v537 = vsel %vm534, %v536, %v532
    %v538 = vmul.f32 %v513, %v537
    %v539 = vmin.f32 %v538, 1.0
    %v540 = vmax.f32 %v539, -1.0
    %v541 = vmul.f32 %v377, %v377
    %v542 = vmin.f32 16.0, %v541
    %v543 = vmul.f32 %v542, 2.1237322e-06
    %v544 = vadd.f32 %v543, 0.00028619796
    %v545 = vmul.f32 %v542, %v544
    %v546 = vadd.f32 %v545, 0.0036580483
    %v547 = vmul.f32 %v542, %v546
    %v548 = vadd.f32 %v547, 0.05243302
    %v549 = vmul.f32 %v542, %v548
    %v550 = vadd.f32 %v549, 0.18741608
    %v551 = vmul.f32 %v542, %v550
    %v552 = vadd.f32 %v551, 1.1283791
    %v553 = vmul.f32 %v377, %v552
    %v554 = vmul.f32 %v542, 3.8918573e-05
    %v555 = vadd.f32 %v554, 0.001143296
    %v556 = vmul.f32 %v542, %v555
    %v557 = vadd.f32 %v556, 0.014752088
    %v558 = vmul.f32 %v542, %v557
    %v559 = vadd.f32 %v558, 0.112945676
    %v560 = vmul.f32 %v542, %v559
    %v561 = vadd.f32 %v560, 0.4994258
    %v562 = vmul.f32 %v542, %v561
    %v563 = vadd.f32 %v562, 1.0
    %v564 = vrcp.pop %v563
    %v565 = vmul.f32 %v563, %v564
    %v566 = vsub.f32 1.0, %v565
    %v567 = vmul.f32 %v564, %v566
    %v568 = vadd.f32 %v564, %v567
    %vm569 = vweird.f32 %v563
    %vm570 = vweird.f32 %v564
    %vm571 = vmor %vm569, %vm570
    %v572 = vsel %vm571, %v564, %v568
    %v573 = vand.u32 2147483647, %v563
    %vm574 = vcmp.eq.f32.partialorder %v573, 8.507059e+37
    %v575 = vand.u32 %v563, 2147483648
    %v576 = vor.u32 1.1754944e-38, %v575
    %v577 = vsel %vm574, %v576, %v572
    %v578 = vmul.f32 %v553, %v577
    %v579 = vmin.f32 %v578, 1.0
    %v580 = vmax.f32 %v579, -1.0
    %v581 = vmul.f32 %v378, %v378
    %v582 = vmin.f32 16.0, %v581
    %v583 = vmul.f32 %v582, 2.1237322e-06
    %v584 = vadd.f32 %v583, 0.00028619796
    %v585 = vmul.f32 %v582, %v584
    %v586 = vadd.f32 %v585, 0.0036580483
    %v587 = vmul.f32 %v582, %v586
    %v588 = vadd.f32 %v587, 0.05243302
    %v589 = vmul.f32 %v582, %v588
    %v590 = vadd.f32 %v589, 0.18741608
    %v591 = vmul.f32 %v582, %v590
    %v592 = vadd.f32 %v591, 1.1283791
    %v593 = vmul.f32 %v378, %v592
    %v594 = vmul.f32 %v582, 3.8918573e-05
    %v595 = vadd.f32 %v594, 0.001143296
    %v596 = vmul.f32 %v582, %v595
    %v597 = vadd.f32 %v596, 0.014752088
    %v598 = vmul.f32 %v582, %v597
    %v599 = vadd.f32 %v598, 0.112945676
    %v600 = vmul.f32 %v582, %v599
    %v601 = vadd.f32 %v600, 0.4994258
    %v602 = vmul.f32 %v582, %v601
    %v603 = vadd.f32 %v602, 1.0
    %v604 = vrcp.pop %v603
    %v605 = vmul.f32 %v603, %v604
    %v606 = vsub.f32 1.0, %v605
    %v607 = vmul.f32 %v604, %v606
    %v608 = vadd.f32 %v604, %v607
    %vm609 = vweird.f32 %v603
    %vm610 = vweird.f32 %v604
    %vm611 = vmor %vm609, %vm610
    %v612 = vsel %vm611, %v604, %v608
    %v613 = vand.u32 2147483647, %v603
    %vm614 = vcmp.eq.f32.partialorder %v613, 8.507059e+37
    %v615 = vand.u32 %v603, 2147483648
    %v616 = vor.u32 1.1754944e-38, %v615
    %v617 = vsel %vm614, %v616, %v612
    %v618 = vmul.f32 %v593, %v617
    %v619 = vmin.f32 %v618, 1.0
    %v620 = vmax.f32 %v619, -1.0
    %v621 = vmul.f32 %v379, %v379
    %v622 = vmin.f32 16.0, %v621
    %v623 = vmul.f32 %v622, 2.1237322e-06
    %v624 = vadd.f32 %v623, 0.00028619796
    %v625 = vmul.f32 %v622, %v624
    %v626 = vadd.f32 %v625, 0.0036580483
    %v627 = vmul.f32 %v622, %v626
    %v628 = vadd.f32 %v627, 0.05243302
    %v629 = vmul.f32 %v622, %v628
    %v630 = vadd.f32 %v629, 0.18741608
    %v631 = vmul.f32 %v622, %v630
    %v632 = vadd.f32 %v631, 1.1283791
    %v633 = vmul.f32 %v379, %v632
    %v634 = vmul.f32 %v622, 3.8918573e-05
    %v635 = vadd.f32 %v634, 0.001143296
    %v636 = vmul.f32 %v622, %v635
    %v637 = vadd.f32 %v636, 0.014752088
    %v638 = vmul.f32 %v622, %v637
    %v639 = vadd.f32 %v638, 0.112945676
    %v640 = vmul.f32 %v622, %v639
    %v641 = vadd.f32 %v640, 0.4994258
    %v642 = vmul.f32 %v622, %v641
    %v643 = vadd.f32 %v642, 1.0
    %v644 = vrcp.pop %v643
    %v645 = vmul.f32 %v643, %v644
    %v646 = vsub.f32 1.0, %v645
    %v647 = vmul.f32 %v644, %v646
    %v648 = vadd.f32 %v644, %v647
    %vm649 = vweird.f32 %v643
    %vm650 = vweird.f32 %v644
    %vm651 = vmor %vm649, %vm650
    %v652 = vsel %vm651, %v644, %v648
    %v653 = vand.u32 2147483647, %v643
    %vm654 = vcmp.eq.f32.partialorder %v653, 8.507059e+37
    %v655 = vand.u32 %v643, 2147483648
    %v656 = vor.u32 1.1754944e-38, %v655
    %v657 = vsel %vm654, %v656, %v652
    %v658 = vmul.f32 %v633, %v657
    %v659 = vmin.f32 %v658, 1.0
    %v660 = vmax.f32 %v659, -1.0
    %v661 = vmul.f32 %v380, %v380
    %v662 = vmin.f32 16.0, %v661
    %v663 = vmul.f32 %v662, 2.1237322e-06
    %v664 = vadd.f32 %v663, 0.00028619796
    %v665 = vmul.f32 %v662, %v664
    %v666 = vadd.f32 %v665, 0.0036580483
    %v667 = vmul.f32 %v662, %v666
    %v668 = vadd.f32 %v667, 0.05243302
    %v669 = vmul.f32 %v662, %v668
    %v670 = vadd.f32 %v669, 0.18741608
    %v671 = vmul.f32 %v662, %v670
    %v672 = vadd.f32 %v671, 1.1283791
    %v673 = vmul.f32 %v380, %v672
    %v674 = vmul.f32 %v662, 3.8918573e-05
    %v675 = vadd.f32 %v674, 0.001143296
    %v676 = vmul.f32 %v662, %v675
    %v677 = vadd.f32 %v676, 0.014752088
    %v678 = vmul.f32 %v662, %v677
    %v679 = vadd.f32 %v678, 0.112945676
    %v680 = vmul.f32 %v662, %v679
    %v681 = vadd.f32 %v680, 0.4994258
    %v682 = vmul.f32 %v662, %v681
    %v683 = vadd.f32 %v682, 1.0
    %v684 = vrcp.pop %v683
    %v685 = vmul.f32 %v683, %v684
    %v686 = vsub.f32 1.0, %v685
    %v687 = vmul.f32 %v684, %v686
    %v688 = vadd.f32 %v684, %v687
    %vm689 = vweird.f32 %v683
    %vm690 = vweird.f32 %v684
    %vm691 = vmor %vm689, %vm690
    %v692 = vsel %vm691, %v684, %v688
    %v693 = vand.u32 2147483647, %v683
    %vm694 = vcmp.eq.f32.partialorder %v693, 8.507059e+37
    %v695 = vand.u32 %v683, 2147483648
    %v696 = vor.u32 1.1754944e-38, %v695
    %v697 = vsel %vm694, %v696, %v692
    %v698 = vmul.f32 %v673, %v697
    %v699 = vmin.f32 %v698, 1.0
    %v700 = vmax.f32 %v699, -1.0
    %v701 = vadd.f32 %v420, 1.0
    %v702 = vadd.f32 %v460, 1.0
    %v703 = vadd.f32 %v500, 1.0
    %v704 = vadd.f32 %v540, 1.0
    %v705 = vadd.f32 %v580, 1.0
    %v706 = vadd.f32 %v620, 1.0
    %v707 = vadd.f32 %v660, 1.0
    %v708 = vadd.f32 %v700, 1.0
    %v709 = vmul.f32 %v365, %v701
    %v710 = vmul.f32 %v366, %v702
    %v711 = vmul.f32 %v367, %v703
    %v712 = vmul.f32 %v368, %v704
    %v713 = vmul.f32 %v369, %v705
    %v714 = vmul.f32 %v370, %v706
    %v715 = vmul.f32 %v371, %v707
    %v716 = vmul.f32 %v372, %v708
    %v717 = vld [vmem:[%s6] sm:$0x1]
    %v719 = vperm.slane %v717, 0
    %v721 = vmul.f32 %v709, %v719
    %v722 = vmul.f32 %v710, %v719
    %v723 = vmul.f32 %v711, %v719
    %v724 = vmul.f32 %v712, %v719
    %v725 = vmul.f32 %v713, %v719
    %v726 = vmul.f32 %v714, %v719
    %v727 = vmul.f32 %v715, %v719
    %v728 = vmul.f32 %v716, %v719
    %v729 = vsel %vm92, %v721, 0.0
    %730 = vadd.xlane.f32.xlu0 %v729
    %v731 = vpop.xlane.xlu0 %730
    %v732 = vsel %vm92, %v722, 0.0
    %733 = vadd.xlane.f32.xlu0 %v732
    %v734 = vpop.xlane.xlu0 %733
    %v735 = vsel %vm92, %v723, 0.0
    %736 = vadd.xlane.f32.xlu0 %v735
    %v737 = vpop.xlane.xlu0 %736
    %v738 = vsel %vm92, %v724, 0.0
    %739 = vadd.xlane.f32.xlu0 %v738
    %v740 = vpop.xlane.xlu0 %739
    %v741 = vsel %vm92, %v725, 0.0
    %742 = vadd.xlane.f32.xlu0 %v741
    %v743 = vpop.xlane.xlu0 %742
    %v744 = vsel %vm92, %v726, 0.0
    %745 = vadd.xlane.f32.xlu0 %v744
    %v746 = vpop.xlane.xlu0 %745
    %v747 = vsel %vm92, %v727, 0.0
    %748 = vadd.xlane.f32.xlu0 %v747
    %v749 = vpop.xlane.xlu0 %748
    %v750 = vsel %vm92, %v728, 0.0
    %751 = vadd.xlane.f32.xlu0 %v750
    %v752 = vpop.xlane.xlu0 %751
    %s753 = sld [smem:[#allocation2]]
    %v754 = vstv %s753
    %v755 = vadd.f32 %v731, %v754
    %v756 = vadd.f32 %v734, %v754
    %v757 = vadd.f32 %v737, %v754
    %v758 = vadd.f32 %v740, %v754
    %v759 = vadd.f32 %v743, %v754
    %v760 = vadd.f32 %v746, %v754
    %v761 = vadd.f32 %v749, %v754
    %v762 = vadd.f32 %v752, %v754
    %v763 = vld [vmem:[#allocation6] sm:$0xff]
    %vm764 = vcmp.eq.f32.partialorder %v763, 0.0
    %v773 = vlaneseq
    %v774 = vand.u32 %v773, 127
    %v775 = vperm.slane %v755, %v774
    %v776 = vperm.slane %v756, %v774
    %v777 = vperm.slane %v757, %v774
    %v778 = vperm.slane %v758, %v774
    %v779 = vperm.slane %v759, %v774
    %v780 = vperm.slane %v760, %v774
    %v781 = vperm.slane %v761, %v774
    %v782 = vperm.slane %v762, %v774
    %vm783 = vcmask 1041409
    %v784 = vsel %vm783, %v776, %v775
    %vm785 = vcmask 1042434
    %v786 = vsel %vm785, %v777, %v784
    %vm787 = vcmask 1043459
    %v788 = vsel %vm787, %v778, %v786
    %vm789 = vcmask 1044484
    %v790 = vsel %vm789, %v779, %v788
    %vm791 = vcmask 1045509
    %v792 = vsel %vm791, %v780, %v790
    %vm793 = vcmask 1046534
    %v794 = vsel %vm793, %v781, %v792
    %vm795 = vcmask 1047559
    %v796 = vsel %vm795, %v782, %v794
    %v798 = vsel %vm764, -inf, %v796
    %vm799 = vcmask 64512
    %v800 = vsel %vm799, %v798, -inf
    %801 = vmax.xlane.f32.xlu0 %v800
    %v802 = vpop.xlane.xlu0 %801
    %v803 = vsub.f32 %v798, %v802
    %v804 = vmul.f32 %v803, 1.442695
    %v805 = vpow.pop %v804
    %v806 = vsel %vm799, %v805, 0.0
    %807 = vadd.xlane.f32.xlu0 %v806
    %v808 = vpop.xlane.xlu0 %807
    %v809 = vrcp.pop %v808
    %v810 = vmul.f32 %v808, %v809
    %v811 = vsub.f32 1.0, %v810
    %v812 = vmul.f32 %v809, %v811
    %v813 = vadd.f32 %v809, %v812
    %vm814 = vweird.f32 %v808
    %vm815 = vweird.f32 %v809
    %vm816 = vmor %vm814, %vm815
    %v817 = vsel %vm816, %v809, %v813
    %v818 = vand.u32 2147483647, %v808
    %vm819 = vcmp.eq.f32.partialorder %v818, 8.507059e+37
    %v820 = vand.u32 %v808, 2147483648
    %v821 = vor.u32 1.1754944e-38, %v820
    %v822 = vsel %vm819, %v821, %v817
    %v823 = vmul.f32 %v805, %v822
    %v824 = vperm.slane %v823, 0
    %v825 = vlaneseq
    %v826 = vshrl.u32 %v825, 7
    %828 = vset.pattern.permute.xlu0 %v826
    %829 = vperm.xlu0 %828, %v824
    %v830 = vpop.permute.xlu0 %829
    %v831 = vperm.slane %v823, 1
    %v832 = vlaneseq
    %v833 = vshrl.u32 %v832, 7
    %835 = vset.pattern.permute.xlu0 %v833
    %836 = vperm.xlu0 %835, %v831
    %v837 = vpop.permute.xlu0 %836
    %v838 = vperm.slane %v823, 2
    %v839 = vlaneseq
    %v840 = vshrl.u32 %v839, 7
    %842 = vset.pattern.permute.xlu0 %v840
    %843 = vperm.xlu0 %842, %v838
    %v844 = vpop.permute.xlu0 %843
    %v845 = vperm.slane %v823, 3
    %v846 = vlaneseq
    %v847 = vshrl.u32 %v846, 7
    %849 = vset.pattern.permute.xlu0 %v847
    %850 = vperm.xlu0 %849, %v845
    %v851 = vpop.permute.xlu0 %850
    %v852 = vperm.slane %v823, 4
    %v853 = vlaneseq
    %v854 = vshrl.u32 %v853, 7
    %856 = vset.pattern.permute.xlu0 %v854
    %857 = vperm.xlu0 %856, %v852
    %v858 = vpop.permute.xlu0 %857
    %v859 = vperm.slane %v823, 5
    %v860 = vlaneseq
    %v861 = vshrl.u32 %v860, 7
    %863 = vset.pattern.permute.xlu0 %v861
    %864 = vperm.xlu0 %863, %v859
    %v865 = vpop.permute.xlu0 %864
    %v866 = vperm.slane %v823, 6
    %v867 = vlaneseq
    %v868 = vshrl.u32 %v867, 7
    %870 = vset.pattern.permute.xlu0 %v868
    %871 = vperm.xlu0 %870, %v866
    %v872 = vpop.permute.xlu0 %871
    %v873 = vperm.slane %v823, 7
    %v874 = vlaneseq
    %v875 = vshrl.u32 %v874, 7
    %877 = vset.pattern.permute.xlu0 %v875
    %878 = vperm.xlu0 %877, %v873
    %v879 = vpop.permute.xlu0 %878
    %v880 = vmul.f32 %v830, %v76
    %v881 = vmul.f32 %v837, %v77
    %v882 = vmul.f32 %v844, %v78
    %v883 = vmul.f32 %v851, %v79
    %v884 = vmul.f32 %v858, %v80
    %v885 = vmul.f32 %v865, %v81
    %v886 = vmul.f32 %v872, %v82
    %v887 = vmul.f32 %v879, %v83
    %v888 = vsel %vm92, %v880, 0.0
    %v889 = vrot.slane %v888, 4
    %v890 = vadd.f32 %v888, %v889
    %v891 = vrot.slane %v890, 2
    %v892 = vadd.f32 %v890, %v891
    %v893 = vrot.slane %v892, 1
    %v894 = vadd.f32 %v892, %v893
    %v895 = vsel %vm92, %v881, 0.0
    %v896 = vrot.slane %v895, 4
    %v897 = vadd.f32 %v895, %v896
    %v898 = vrot.slane %v897, 2
    %v899 = vadd.f32 %v897, %v898
    %v900 = vrot.slane %v899, 1
    %v901 = vadd.f32 %v899, %v900
    %v902 = vsel %vm92, %v882, 0.0
    %v903 = vrot.slane %v902, 4
    %v904 = vadd.f32 %v902, %v903
    %v905 = vrot.slane %v904, 2
    %v906 = vadd.f32 %v904, %v905
    %v907 = vrot.slane %v906, 1
    %v908 = vadd.f32 %v906, %v907
    %v909 = vsel %vm92, %v883, 0.0
    %v910 = vrot.slane %v909, 4
    %v911 = vadd.f32 %v909, %v910
    %v912 = vrot.slane %v911, 2
    %v913 = vadd.f32 %v911, %v912
    %v914 = vrot.slane %v913, 1
    %v915 = vadd.f32 %v913, %v914
    %v916 = vsel %vm92, %v884, 0.0
    %v917 = vrot.slane %v916, 4
    %v918 = vadd.f32 %v916, %v917
    %v919 = vrot.slane %v918, 2
    %v920 = vadd.f32 %v918, %v919
    %v921 = vrot.slane %v920, 1
    %v922 = vadd.f32 %v920, %v921
    %v923 = vsel %vm92, %v885, 0.0
    %v924 = vrot.slane %v923, 4
    %v925 = vadd.f32 %v923, %v924
    %v926 = vrot.slane %v925, 2
    %v927 = vadd.f32 %v925, %v926
    %v928 = vrot.slane %v927, 1
    %v929 = vadd.f32 %v927, %v928
    %v930 = vsel %vm92, %v886, 0.0
    %v931 = vrot.slane %v930, 4
    %v932 = vadd.f32 %v930, %v931
    %v933 = vrot.slane %v932, 2
    %v934 = vadd.f32 %v932, %v933
    %v935 = vrot.slane %v934, 1
    %v936 = vadd.f32 %v934, %v935
    %v937 = vsel %vm92, %v887, 0.0
    %v938 = vrot.slane %v937, 4
    %v939 = vadd.f32 %v937, %v938
    %v940 = vrot.slane %v939, 2
    %v941 = vadd.f32 %v939, %v940
    %v942 = vrot.slane %v941, 1
    %v943 = vadd.f32 %v941, %v942
    %v952 = vsel %vm783, %v901, %v894
    %v953 = vsel %vm785, %v908, %v952
    %v954 = vsel %vm787, %v915, %v953
    %v955 = vsel %vm789, %v922, %v954
    %v956 = vsel %vm791, %v929, %v955
    %v957 = vsel %vm793, %v936, %v956
    %v958 = vsel %vm795, %v943, %v957
    %960 = vst.msk [vmem:[#allocation9] sm:$0xff] %vm92, %v958
    // Predicated region
    $region46: #{tpu_custom_call.1} parent=1 // pred_check
      _
    $region47: #{tpu_custom_call.1} parent=1 // pred_check_branch
      %962 = sbr.rel (0) target = $region49
    $region48: #{tpu_custom_call.1} parent=1 // pred_region
      %964 = vsyncadd [#allocation5], 0
      %s966 = sshll.u32 [#allocation9], 4
      %s967 = int_to_ptr.vmem [resolvable:$true] %s966
      %s968 = sshll.u32 %s8, 4
      %s969 = int_to_ptr.hbm [resolvable:$true] %s968
      %971 = dma.vmem_to_hbm [thread:$0]  %s967, 128, %s969, [#allocation5]
    $region49: #{tpu_custom_call.1} parent=1 // pred_fallthru
      _
    // Predicated region
    $region50: #{tpu_custom_call.1} parent=1 // pred_check
      _
    $region51: #{tpu_custom_call.1} parent=1 // pred_check_branch
      %973 = sbr.rel (0) target = $region53
    $region52: #{tpu_custom_call.1} parent=1 // pred_region
      %975 = dma.done [#allocation5], 128
    $region53: #{tpu_custom_call.1} parent=1 // pred_fallthru
      _
    %976 = vsyncpa [#allocation4], 1
    %977 = vsyncpa [#allocation7], 1
    %978 = vsyncpa [#allocation5], 1

</llo_original>
